<compile_context>
chip_gen: v5e
topology: v5e:2x2
jax: 0.10.0
libtpu: 0.0.40
codegen_flags: <defaults>
</compile_context>

<pallas_src>
import numpy as np
import jax
import jax.numpy as jnp
from jax import lax
from jax.experimental import pallas as pl
from jax.experimental.pallas import tpu as pltpu


# ---------------------------------------------------------------------------
# Small-K channel matmul: (Cout, Cin) @ (Cin, P) -> (Cout, P) in f32
# ---------------------------------------------------------------------------
def _channel_matmul(w, x):
    """For tiny channel counts the MXU systolic array is >95% zero padding, so do
    VPU broadcast-MACs over the contraction dim; use the MXU for real channel
    counts (K >= 32)."""
    k = w.shape[1]
    if k >= 32:
        return jnp.dot(w, x, preferred_element_type=jnp.float32)
    out = w[:, 0:1] * x[0:1, :]
    for kk in range(1, k):
        out = out + w[:, kk:kk + 1] * x[kk:kk + 1, :]
    return out


# ---------------------------------------------------------------------------
# Fused Pallas kernel (one grid step = one batch item, whole image, lane-dense)
# ---------------------------------------------------------------------------
def make_bottleneck_kernel(*, H, W, stride, use_residual):
    P = H * W

    def kernel(*refs):
        if stride == 1:
            (x_ref, col_ref, w1_ref, b1_ref, w2_ref, b2_ref,
             w3_ref, b3_ref, o_ref) = refs
            sel_ref = None
        else:
            (x_ref, col_ref, w1_ref, b1_ref, w2_ref, b2_ref,
             w3_ref, b3_ref, sel_ref, o_ref) = refs

        x = x_ref[0]                                        # (Cin, P) lane-dense

        # ---- stage 1: 1x1 expand (BN scale folded into w1) + bias + ReLU6 ----
        hid = _channel_matmul(w1_ref[...], x)               # (Chid, P)
        hid = jnp.clip(hid + b1_ref[...], 0.0, 6.0)

        # ---- stage 2: 3x3 depthwise (BN scale folded) via lane rolls + masks --
        # Each tap (dy, dx) is a circular lane shift of the flattened hidden
        # image; positions whose source pixel lies outside the image (torch's
        # zero padding) are masked to zero before accumulation.
        flat = lax.broadcasted_iota(jnp.int32, (1, P), 1)   # flat spatial index
        col = col_ref[...]                                  # (1, P) int32, i % W
        row_ok = (flat >= W, None, flat < (H - 1) * W)      # dy = 0, 1, 2
        col_ok = (col >= 1, None, col <= W - 2)             # dx = 0, 1, 2

        w2 = w2_ref[...]                                    # (Chid, 9)
        acc = hid * w2[:, 4:5]                              # center tap (1,1)
        for dy in range(3):
            for dx in range(3):
                if dy == 1 and dx == 1:
                    continue
                s = (dy - 1) * W + (dx - 1)
                tap = pltpu.roll(hid, shift=(-s) % P, axis=1)  # XLU lane rotate
                m = row_ok[dy]
                if col_ok[dx] is not None:
                    m = col_ok[dx] if m is None else (m & col_ok[dx])
                if m is not None:
                    tap = jnp.where(m, tap, 0.0)
                acc = acc + tap * w2[:, 3 * dy + dx:3 * dy + dx + 1]
        d = jnp.clip(acc + b2_ref[...], 0.0, 6.0)           # (Chid, P)

        if sel_ref is not None:
            # stride-2 decimation: pick the strided spatial positions with one
            # lane-dense MXU matmul against a one-hot selection matrix.
            d = jnp.dot(d, sel_ref[...], preferred_element_type=jnp.float32)

        # ---- stage 3: 1x1 project (BN scale folded into w3) + bias ------------
        out = _channel_matmul(w3_ref[...], d) + b3_ref[...]  # (Cout, P_out)
        if use_residual:
            out = out + x                                    # stride==1, Cin==Cout
        o_ref[0] = out.astype(o_ref.dtype)                   # lane-dense store

    return kernel


# ---------------------------------------------------------------------------
# Wrapper
# ---------------------------------------------------------------------------
def bottleneck_forward(x_nchw, params, *, stride, use_residual):
    n, cin, h, w = x_nchw.shape
    chid = params["w1"].shape[0]
    cout = params["w3"].shape[0]
    if use_residual:
        assert stride == 1 and cin == cout

    p = h * w
    ho = (h - 1) // stride + 1
    wo = (w - 1) // stride + 1
    po = ho * wo

    # Fold inference-mode BN scales into the conv weights (host side, free).
    w1f = (params["w1"] * params["s1"][:, None]).astype(jnp.float32)        # (chid, cin)
    w2f = (params["w2"] * params["s2"][:, None, None]).reshape(chid, 9).astype(jnp.float32)
    w3f = (params["w3"] * params["s3"][:, None]).astype(jnp.float32)        # (cout, chid)
    b1 = params["b1"].reshape(chid, 1).astype(jnp.float32)
    b2 = params["b2"].reshape(chid, 1).astype(jnp.float32)
    b3 = params["b3"].reshape(cout, 1).astype(jnp.float32)

    # NCHW -> (N, C, H*W): free reshape (no transpose, no padding pass over HBM).
    x_flat = x_nchw.reshape(n, cin, p).astype(jnp.float32)

    # Column index of each flat spatial position (avoids an in-kernel vector mod).
    col_ids = jnp.asarray((np.arange(p, dtype=np.int32) % w).reshape(1, p))

    args = [x_flat, col_ids, w1f, b1, w2f, b2, w3f, b3]
    in_specs = [
        pl.BlockSpec((1, cin, p), lambda b: (b, 0, 0)),      # x, lane-dense spatial
        pl.BlockSpec((1, p), lambda b: (0, 0)),              # col ids
        pl.BlockSpec((chid, cin), lambda b: (0, 0)),         # w1 (BN folded)
        pl.BlockSpec((chid, 1), lambda b: (0, 0)),           # b1
        pl.BlockSpec((chid, 9), lambda b: (0, 0)),           # w2 (BN folded)
        pl.BlockSpec((chid, 1), lambda b: (0, 0)),           # b2
        pl.BlockSpec((cout, chid), lambda b: (0, 0)),        # w3 (BN folded)
        pl.BlockSpec((cout, 1), lambda b: (0, 0)),           # b3
    ]
    if stride != 1:
        sel = np.zeros((p, po), np.float32)
        for r in range(ho):
            for c in range(wo):
                sel[(stride * r) * w + stride * c, r * wo + c] = 1.0
        args.append(jnp.asarray(sel))
        in_specs.append(pl.BlockSpec((p, po), lambda b: (0, 0)))

    kernel = make_bottleneck_kernel(H=h, W=w, stride=stride, use_residual=use_residual)

    out_flat = pl.pallas_call(
        kernel,
        out_shape=jax.ShapeDtypeStruct((n, cout, po), jnp.float32),
        grid=(n,),
        in_specs=in_specs,
        out_specs=pl.BlockSpec((1, cout, po), lambda b: (b, 0, 0)),
        compiler_params=pltpu.CompilerParams(
            dimension_semantics=("parallel",),     # splits batch across v7x's 2 TCs
            vmem_limit_bytes=32 * 1024 * 1024,     # ample headroom on all gens
        ),
    )(*args)

    # (N, Cout, HO*WO) -> NCHW is a free reshape (no transpose).
    return out_flat.reshape(n, cout, ho, wo)


# ---------------------------------------------------------------------------
# Pure-JAX reference (independent, unfolded math, NCHW) for correctness check
# ---------------------------------------------------------------------------
def bottleneck_reference(x, params, *, stride, use_residual):
    def bn(t, s, b):
        return t * s[None, :, None, None] + b[None, :, None, None]

    h = jnp.einsum("nchw,dc->ndhw", x.astype(jnp.float32), params["w1"])
    h = jnp.clip(bn(h, params["s1"], params["b1"]), 0.0, 6.0)
    hp = jnp.pad(h, ((0, 0), (0, 0), (1, 1), (1, 1)))
    n, c, H, W = h.shape
    ho = (H - 1) // stride + 1
    wo = (W - 1) // stride + 1
    acc = jnp.zeros((n, c, ho, wo), jnp.float32)
    for dy in range(3):
        for dx in range(3):
            acc = acc + hp[:, :, dy:dy + (ho - 1) * stride + 1:stride,
                           dx:dx + (wo - 1) * stride + 1:stride] \
                        * params["w2"][None, :, dy, dx, None, None]
    d = jnp.clip(bn(acc, params["s2"], params["b2"]), 0.0, 6.0)
    out = jnp.einsum("ndhw,od->nohw", d, params["w3"])
    out = bn(out, params["s3"], params["b3"])
    if use_residual:
        out = out + x
    return out


# ---------------------------------------------------------------------------
def make_params(key, in_channels, out_channels, expansion_factor):
    hidden = in_channels * expansion_factor
    k1, k2, k3 = jax.random.split(key, 3)
    eps = 1e-5

    def bn(c):
        # PyTorch fresh-init BatchNorm2d in eval mode: gamma=1, beta=0, mean=0, var=1
        scale = jnp.full((c,), 1.0 / np.sqrt(1.0 + eps), jnp.float32)
        bias = jnp.zeros((c,), jnp.float32)
        return scale, bias

    s1, b1 = bn(hidden)
    s2, b2 = bn(hidden)
    s3, b3 = bn(out_channels)
    return {
        # conv1.weight (hidden, in, 1, 1) -> (hidden, in)
        "w1": jax.random.normal(k1, (hidden, in_channels), jnp.float32) * 0.1,
        # conv2.weight (hidden, 1, 3, 3) -> (hidden, 3, 3)
        "w2": jax.random.normal(k2, (hidden, 3, 3), jnp.float32) * 0.1,
        # conv3.weight (out, hidden, 1, 1) -> (out, hidden)
        "w3": jax.random.normal(k3, (out_channels, hidden), jnp.float32) * 0.1,
        "s1": s1, "b1": b1, "s2": s2, "b2": b2, "s3": s3, "b3": b3,
    }


if __name__ == "__main__":
    # Small config: in_channels=4, out_channels=4, expansion_factor=2, stride=1
    N, CIN, H, W = 2, 4, 16, 16
    COUT, EXPANSION, STRIDE = 4, 2, 1
    use_residual = (CIN == COUT) and (STRIDE == 1)

    key = jax.random.PRNGKey(0)
    kx, kp = jax.random.split(key)
    x = jax.random.normal(kx, (N, CIN, H, W), jnp.float32)
    params = make_params(kp, CIN, COUT, EXPANSION)

    out = bottleneck_forward(x, params, stride=STRIDE, use_residual=use_residual)
    out = jax.block_until_ready(out)

    ref = bottleneck_reference(x, params, stride=STRIDE, use_residual=use_residual)
    np.testing.assert_allclose(np.asarray(out), np.asarray(ref), rtol=1e-5, atol=1e-5)

    print("KERNEL_OK")
</pallas_src>

<mosaic_0001>
module attributes {stable_mosaic.version = 11 : i64} {
  func.func @kernel(%arg0: i32, %arg1: memref<1x4x256xf32, #tpu.memory_space<vmem>>, %arg2: memref<1x256xi32, #tpu.memory_space<vmem>>, %arg3: memref<8x4xf32, #tpu.memory_space<vmem>>, %arg4: memref<8x1xf32, #tpu.memory_space<vmem>>, %arg5: memref<8x9xf32, #tpu.memory_space<vmem>>, %arg6: memref<8x1xf32, #tpu.memory_space<vmem>>, %arg7: memref<4x8xf32, #tpu.memory_space<vmem>>, %arg8: memref<4x1xf32, #tpu.memory_space<vmem>>, %arg9: memref<1x4x256xf32, #tpu.memory_space<vmem>>) attributes {dimension_semantics = [#tpu.dimension_semantics<parallel>], iteration_bounds = array<i64: 2>, scalar_prefetch = 0 : i64, scratch_operands = 0 : i64, tpu.core_type = #tpu.core_type<tc>, window_params = [{transform_indices = @transform_0, window_bounds = array<i64: 1, 4, 256>}, {pipeline_mode = #tpu.pipeline_mode<synchronous>, transform_indices = @transform_1, window_bounds = array<i64: 1, 256>}, {pipeline_mode = #tpu.pipeline_mode<synchronous>, transform_indices = @transform_2, window_bounds = array<i64: 8, 4>}, {pipeline_mode = #tpu.pipeline_mode<synchronous>, transform_indices = @transform_3, window_bounds = array<i64: 8, 1>}, {pipeline_mode = #tpu.pipeline_mode<synchronous>, transform_indices = @transform_4, window_bounds = array<i64: 8, 9>}, {pipeline_mode = #tpu.pipeline_mode<synchronous>, transform_indices = @transform_5, window_bounds = array<i64: 8, 1>}, {pipeline_mode = #tpu.pipeline_mode<synchronous>, transform_indices = @transform_6, window_bounds = array<i64: 4, 8>}, {pipeline_mode = #tpu.pipeline_mode<synchronous>, transform_indices = @transform_7, window_bounds = array<i64: 4, 1>}, {transform_indices = @transform_8, window_bounds = array<i64: 1, 4, 256>}]} {
    %c0 = arith.constant 0 : index
    %c0_0 = arith.constant 0 : index
    %c0_1 = arith.constant 0 : index
    %0 = vector.load %arg1[%c0, %c0_0, %c0_1] : memref<1x4x256xf32, #tpu.memory_space<vmem>>, vector<1x4x256xf32>
    %1 = vector.shape_cast %0 : vector<1x4x256xf32> to vector<4x256xf32>
    %c0_2 = arith.constant 0 : index
    %c0_3 = arith.constant 0 : index
    %2 = vector.load %arg3[%c0_2, %c0_3] : memref<8x4xf32, #tpu.memory_space<vmem>>, vector<8x4xf32>
    %3 = vector.extract_strided_slice %2 {offsets = [0, 0], sizes = [8, 1], strides = [1, 1]} : vector<8x4xf32> to vector<8x1xf32>
    %4 = vector.extract_strided_slice %1 {offsets = [0, 0], sizes = [1, 256], strides = [1, 1]} : vector<4x256xf32> to vector<1x256xf32>
    %5 = vector.broadcast %3 : vector<8x1xf32> to vector<8x256xf32>
    %6 = vector.broadcast %4 : vector<1x256xf32> to vector<8x256xf32>
    %7 = arith.mulf %5, %6 : vector<8x256xf32>
    %8 = vector.extract_strided_slice %2 {offsets = [0, 1], sizes = [8, 1], strides = [1, 1]} : vector<8x4xf32> to vector<8x1xf32>
    %9 = vector.extract_strided_slice %1 {offsets = [1, 0], sizes = [1, 256], strides = [1, 1]} : vector<4x256xf32> to vector<1x256xf32>
    %10 = vector.broadcast %8 : vector<8x1xf32> to vector<8x256xf32>
    %11 = vector.broadcast %9 : vector<1x256xf32> to vector<8x256xf32>
    %12 = arith.mulf %10, %11 : vector<8x256xf32>
    %13 = arith.addf %7, %12 : vector<8x256xf32>
    %14 = vector.extract_strided_slice %2 {offsets = [0, 2], sizes = [8, 1], strides = [1, 1]} : vector<8x4xf32> to vector<8x1xf32>
    %15 = vector.extract_strided_slice %1 {offsets = [2, 0], sizes = [1, 256], strides = [1, 1]} : vector<4x256xf32> to vector<1x256xf32>
    %16 = vector.broadcast %14 : vector<8x1xf32> to vector<8x256xf32>
    %17 = vector.broadcast %15 : vector<1x256xf32> to vector<8x256xf32>
    %18 = arith.mulf %16, %17 : vector<8x256xf32>
    %19 = arith.addf %13, %18 : vector<8x256xf32>
    %20 = vector.extract_strided_slice %2 {offsets = [0, 3], sizes = [8, 1], strides = [1, 1]} : vector<8x4xf32> to vector<8x1xf32>
    %21 = vector.extract_strided_slice %1 {offsets = [3, 0], sizes = [1, 256], strides = [1, 1]} : vector<4x256xf32> to vector<1x256xf32>
    %22 = vector.broadcast %20 : vector<8x1xf32> to vector<8x256xf32>
    %23 = vector.broadcast %21 : vector<1x256xf32> to vector<8x256xf32>
    %24 = arith.mulf %22, %23 : vector<8x256xf32>
    %25 = arith.addf %19, %24 : vector<8x256xf32>
    %c0_4 = arith.constant 0 : index
    %c0_5 = arith.constant 0 : index
    %26 = vector.load %arg4[%c0_4, %c0_5] : memref<8x1xf32, #tpu.memory_space<vmem>>, vector<8x1xf32>
    %27 = vector.broadcast %26 : vector<8x1xf32> to vector<8x256xf32>
    %28 = arith.addf %25, %27 : vector<8x256xf32>
    %cst = arith.constant 0.000000e+00 : f32
    %cst_6 = arith.constant 6.000000e+00 : f32
    %29 = vector.broadcast %cst : f32 to vector<8x256xf32>
    %30 = arith.maximumf %29, %28 : vector<8x256xf32>
    %31 = vector.broadcast %cst_6 : f32 to vector<8x256xf32>
    %32 = arith.minimumf %31, %30 : vector<8x256xf32>
    %33 = tpu.iota {dimensions = array<i32: 1>} : vector<1x256xi32>
    %c0_7 = arith.constant 0 : index
    %c0_8 = arith.constant 0 : index
    %34 = vector.load %arg2[%c0_7, %c0_8] : memref<1x256xi32, #tpu.memory_space<vmem>>, vector<1x256xi32>
    %c16_i32 = arith.constant 16 : i32
    %35 = vector.broadcast %c16_i32 : i32 to vector<1x256xi32>
    %36 = arith.cmpi sge, %33, %35 : vector<1x256xi32>
    %c240_i32 = arith.constant 240 : i32
    %37 = vector.broadcast %c240_i32 : i32 to vector<1x256xi32>
    %38 = arith.cmpi slt, %33, %37 : vector<1x256xi32>
    %c1_i32 = arith.constant 1 : i32
    %39 = vector.broadcast %c1_i32 : i32 to vector<1x256xi32>
    %40 = arith.cmpi sge, %34, %39 : vector<1x256xi32>
    %c14_i32 = arith.constant 14 : i32
    %41 = vector.broadcast %c14_i32 : i32 to vector<1x256xi32>
    %42 = arith.cmpi sle, %34, %41 : vector<1x256xi32>
    %c0_9 = arith.constant 0 : index
    %c0_10 = arith.constant 0 : index
    %43 = vector.load %arg5[%c0_9, %c0_10] : memref<8x9xf32, #tpu.memory_space<vmem>>, vector<8x9xf32>
    %44 = vector.extract_strided_slice %43 {offsets = [0, 4], sizes = [8, 1], strides = [1, 1]} : vector<8x9xf32> to vector<8x1xf32>
    %45 = vector.broadcast %44 : vector<8x1xf32> to vector<8x256xf32>
    %46 = arith.mulf %32, %45 : vector<8x256xf32>
    %c17_i32 = arith.constant 17 : i32
    %47 = tpu.dynamic_rotate %32 by %c17_i32 dim 1 : vector<8x256xf32>, i32 -> vector<8x256xf32>
    %48 = arith.andi %36, %40 : vector<1x256xi1>
    %cst_11 = arith.constant 0.000000e+00 : f32
    %49 = vector.shape_cast %48 : vector<1x256xi1> to vector<1x256xi1>
    %50 = vector.broadcast %49 : vector<1x256xi1> to vector<8x256xi1>
    %51 = vector.broadcast %cst_11 : f32 to vector<8x256xf32>
    %52 = arith.select %50, %47, %51 : vector<8x256xi1>, vector<8x256xf32>
    %53 = vector.extract_strided_slice %43 {offsets = [0, 0], sizes = [8, 1], strides = [1, 1]} : vector<8x9xf32> to vector<8x1xf32>
    %54 = vector.broadcast %53 : vector<8x1xf32> to vector<8x256xf32>
    %55 = arith.mulf %52, %54 : vector<8x256xf32>
    %56 = arith.addf %46, %55 : vector<8x256xf32>
    %c16_i32_12 = arith.constant 16 : i32
    %57 = tpu.dynamic_rotate %32 by %c16_i32_12 dim 1 : vector<8x256xf32>, i32 -> vector<8x256xf32>
    %cst_13 = arith.constant 0.000000e+00 : f32
    %58 = vector.shape_cast %36 : vector<1x256xi1> to vector<1x256xi1>
    %59 = vector.broadcast %58 : vector<1x256xi1> to vector<8x256xi1>
    %60 = vector.broadcast %cst_13 : f32 to vector<8x256xf32>
    %61 = arith.select %59, %57, %60 : vector<8x256xi1>, vector<8x256xf32>
    %62 = vector.extract_strided_slice %43 {offsets = [0, 1], sizes = [8, 1], strides = [1, 1]} : vector<8x9xf32> to vector<8x1xf32>
    %63 = vector.broadcast %62 : vector<8x1xf32> to vector<8x256xf32>
    %64 = arith.mulf %61, %63 : vector<8x256xf32>
    %65 = arith.addf %56, %64 : vector<8x256xf32>
    %c15_i32 = arith.constant 15 : i32
    %66 = tpu.dynamic_rotate %32 by %c15_i32 dim 1 : vector<8x256xf32>, i32 -> vector<8x256xf32>
    %67 = arith.andi %36, %42 : vector<1x256xi1>
    %cst_14 = arith.constant 0.000000e+00 : f32
    %68 = vector.shape_cast %67 : vector<1x256xi1> to vector<1x256xi1>
    %69 = vector.broadcast %68 : vector<1x256xi1> to vector<8x256xi1>
    %70 = vector.broadcast %cst_14 : f32 to vector<8x256xf32>
    %71 = arith.select %69, %66, %70 : vector<8x256xi1>, vector<8x256xf32>
    %72 = vector.extract_strided_slice %43 {offsets = [0, 2], sizes = [8, 1], strides = [1, 1]} : vector<8x9xf32> to vector<8x1xf32>
    %73 = vector.broadcast %72 : vector<8x1xf32> to vector<8x256xf32>
    %74 = arith.mulf %71, %73 : vector<8x256xf32>
    %75 = arith.addf %65, %74 : vector<8x256xf32>
    %c1_i32_15 = arith.constant 1 : i32
    %76 = tpu.dynamic_rotate %32 by %c1_i32_15 dim 1 : vector<8x256xf32>, i32 -> vector<8x256xf32>
    %cst_16 = arith.constant 0.000000e+00 : f32
    %77 = vector.shape_cast %40 : vector<1x256xi1> to vector<1x256xi1>
    %78 = vector.broadcast %77 : vector<1x256xi1> to vector<8x256xi1>
    %79 = vector.broadcast %cst_16 : f32 to vector<8x256xf32>
    %80 = arith.select %78, %76, %79 : vector<8x256xi1>, vector<8x256xf32>
    %81 = vector.extract_strided_slice %43 {offsets = [0, 3], sizes = [8, 1], strides = [1, 1]} : vector<8x9xf32> to vector<8x1xf32>
    %82 = vector.broadcast %81 : vector<8x1xf32> to vector<8x256xf32>
    %83 = arith.mulf %80, %82 : vector<8x256xf32>
    %84 = arith.addf %75, %83 : vector<8x256xf32>
    %c255_i32 = arith.constant 255 : i32
    %85 = tpu.dynamic_rotate %32 by %c255_i32 dim 1 : vector<8x256xf32>, i32 -> vector<8x256xf32>
    %cst_17 = arith.constant 0.000000e+00 : f32
    %86 = vector.shape_cast %42 : vector<1x256xi1> to vector<1x256xi1>
    %87 = vector.broadcast %86 : vector<1x256xi1> to vector<8x256xi1>
    %88 = vector.broadcast %cst_17 : f32 to vector<8x256xf32>
    %89 = arith.select %87, %85, %88 : vector<8x256xi1>, vector<8x256xf32>
    %90 = vector.extract_strided_slice %43 {offsets = [0, 5], sizes = [8, 1], strides = [1, 1]} : vector<8x9xf32> to vector<8x1xf32>
    %91 = vector.broadcast %90 : vector<8x1xf32> to vector<8x256xf32>
    %92 = arith.mulf %89, %91 : vector<8x256xf32>
    %93 = arith.addf %84, %92 : vector<8x256xf32>
    %c241_i32 = arith.constant 241 : i32
    %94 = tpu.dynamic_rotate %32 by %c241_i32 dim 1 : vector<8x256xf32>, i32 -> vector<8x256xf32>
    %95 = arith.andi %38, %40 : vector<1x256xi1>
    %cst_18 = arith.constant 0.000000e+00 : f32
    %96 = vector.shape_cast %95 : vector<1x256xi1> to vector<1x256xi1>
    %97 = vector.broadcast %96 : vector<1x256xi1> to vector<8x256xi1>
    %98 = vector.broadcast %cst_18 : f32 to vector<8x256xf32>
    %99 = arith.select %97, %94, %98 : vector<8x256xi1>, vector<8x256xf32>
    %100 = vector.extract_strided_slice %43 {offsets = [0, 6], sizes = [8, 1], strides = [1, 1]} : vector<8x9xf32> to vector<8x1xf32>
    %101 = vector.broadcast %100 : vector<8x1xf32> to vector<8x256xf32>
    %102 = arith.mulf %99, %101 : vector<8x256xf32>
    %103 = arith.addf %93, %102 : vector<8x256xf32>
    %c240_i32_19 = arith.constant 240 : i32
    %104 = tpu.dynamic_rotate %32 by %c240_i32_19 dim 1 : vector<8x256xf32>, i32 -> vector<8x256xf32>
    %cst_20 = arith.constant 0.000000e+00 : f32
    %105 = vector.shape_cast %38 : vector<1x256xi1> to vector<1x256xi1>
    %106 = vector.broadcast %105 : vector<1x256xi1> to vector<8x256xi1>
    %107 = vector.broadcast %cst_20 : f32 to vector<8x256xf32>
    %108 = arith.select %106, %104, %107 : vector<8x256xi1>, vector<8x256xf32>
    %109 = vector.extract_strided_slice %43 {offsets = [0, 7], sizes = [8, 1], strides = [1, 1]} : vector<8x9xf32> to vector<8x1xf32>
    %110 = vector.broadcast %109 : vector<8x1xf32> to vector<8x256xf32>
    %111 = arith.mulf %108, %110 : vector<8x256xf32>
    %112 = arith.addf %103, %111 : vector<8x256xf32>
    %c239_i32 = arith.constant 239 : i32
    %113 = tpu.dynamic_rotate %32 by %c239_i32 dim 1 : vector<8x256xf32>, i32 -> vector<8x256xf32>
    %114 = arith.andi %38, %42 : vector<1x256xi1>
    %cst_21 = arith.constant 0.000000e+00 : f32
    %115 = vector.shape_cast %114 : vector<1x256xi1> to vector<1x256xi1>
    %116 = vector.broadcast %115 : vector<1x256xi1> to vector<8x256xi1>
    %117 = vector.broadcast %cst_21 : f32 to vector<8x256xf32>
    %118 = arith.select %116, %113, %117 : vector<8x256xi1>, vector<8x256xf32>
    %119 = vector.extract_strided_slice %43 {offsets = [0, 8], sizes = [8, 1], strides = [1, 1]} : vector<8x9xf32> to vector<8x1xf32>
    %120 = vector.broadcast %119 : vector<8x1xf32> to vector<8x256xf32>
    %121 = arith.mulf %118, %120 : vector<8x256xf32>
    %122 = arith.addf %112, %121 : vector<8x256xf32>
    %c0_22 = arith.constant 0 : index
    %c0_23 = arith.constant 0 : index
    %123 = vector.load %arg6[%c0_22, %c0_23] : memref<8x1xf32, #tpu.memory_space<vmem>>, vector<8x1xf32>
    %124 = vector.broadcast %123 : vector<8x1xf32> to vector<8x256xf32>
    %125 = arith.addf %122, %124 : vector<8x256xf32>
    %cst_24 = arith.constant 0.000000e+00 : f32
    %cst_25 = arith.constant 6.000000e+00 : f32
    %126 = vector.broadcast %cst_24 : f32 to vector<8x256xf32>
    %127 = arith.maximumf %126, %125 : vector<8x256xf32>
    %128 = vector.broadcast %cst_25 : f32 to vector<8x256xf32>
    %129 = arith.minimumf %128, %127 : vector<8x256xf32>
    %c0_26 = arith.constant 0 : index
    %c0_27 = arith.constant 0 : index
    %130 = vector.load %arg7[%c0_26, %c0_27] : memref<4x8xf32, #tpu.memory_space<vmem>>, vector<4x8xf32>
    %131 = vector.extract_strided_slice %130 {offsets = [0, 0], sizes = [4, 1], strides = [1, 1]} : vector<4x8xf32> to vector<4x1xf32>
    %132 = vector.extract_strided_slice %129 {offsets = [0, 0], sizes = [1, 256], strides = [1, 1]} : vector<8x256xf32> to vector<1x256xf32>
    %133 = vector.broadcast %131 : vector<4x1xf32> to vector<4x256xf32>
    %134 = vector.broadcast %132 : vector<1x256xf32> to vector<4x256xf32>
    %135 = arith.mulf %133, %134 : vector<4x256xf32>
    %136 = vector.extract_strided_slice %130 {offsets = [0, 1], sizes = [4, 1], strides = [1, 1]} : vector<4x8xf32> to vector<4x1xf32>
    %137 = vector.extract_strided_slice %129 {offsets = [1, 0], sizes = [1, 256], strides = [1, 1]} : vector<8x256xf32> to vector<1x256xf32>
    %138 = vector.broadcast %136 : vector<4x1xf32> to vector<4x256xf32>
    %139 = vector.broadcast %137 : vector<1x256xf32> to vector<4x256xf32>
    %140 = arith.mulf %138, %139 : vector<4x256xf32>
    %141 = arith.addf %135, %140 : vector<4x256xf32>
    %142 = vector.extract_strided_slice %130 {offsets = [0, 2], sizes = [4, 1], strides = [1, 1]} : vector<4x8xf32> to vector<4x1xf32>
    %143 = vector.extract_strided_slice %129 {offsets = [2, 0], sizes = [1, 256], strides = [1, 1]} : vector<8x256xf32> to vector<1x256xf32>
    %144 = vector.broadcast %142 : vector<4x1xf32> to vector<4x256xf32>
    %145 = vector.broadcast %143 : vector<1x256xf32> to vector<4x256xf32>
    %146 = arith.mulf %144, %145 : vector<4x256xf32>
    %147 = arith.addf %141, %146 : vector<4x256xf32>
    %148 = vector.extract_strided_slice %130 {offsets = [0, 3], sizes = [4, 1], strides = [1, 1]} : vector<4x8xf32> to vector<4x1xf32>
    %149 = vector.extract_strided_slice %129 {offsets = [3, 0], sizes = [1, 256], strides = [1, 1]} : vector<8x256xf32> to vector<1x256xf32>
    %150 = vector.broadcast %148 : vector<4x1xf32> to vector<4x256xf32>
    %151 = vector.broadcast %149 : vector<1x256xf32> to vector<4x256xf32>
    %152 = arith.mulf %150, %151 : vector<4x256xf32>
    %153 = arith.addf %147, %152 : vector<4x256xf32>
    %154 = vector.extract_strided_slice %130 {offsets = [0, 4], sizes = [4, 1], strides = [1, 1]} : vector<4x8xf32> to vector<4x1xf32>
    %155 = vector.extract_strided_slice %129 {offsets = [4, 0], sizes = [1, 256], strides = [1, 1]} : vector<8x256xf32> to vector<1x256xf32>
    %156 = vector.broadcast %154 : vector<4x1xf32> to vector<4x256xf32>
    %157 = vector.broadcast %155 : vector<1x256xf32> to vector<4x256xf32>
    %158 = arith.mulf %156, %157 : vector<4x256xf32>
    %159 = arith.addf %153, %158 : vector<4x256xf32>
    %160 = vector.extract_strided_slice %130 {offsets = [0, 5], sizes = [4, 1], strides = [1, 1]} : vector<4x8xf32> to vector<4x1xf32>
    %161 = vector.extract_strided_slice %129 {offsets = [5, 0], sizes = [1, 256], strides = [1, 1]} : vector<8x256xf32> to vector<1x256xf32>
    %162 = vector.broadcast %160 : vector<4x1xf32> to vector<4x256xf32>
    %163 = vector.broadcast %161 : vector<1x256xf32> to vector<4x256xf32>
    %164 = arith.mulf %162, %163 : vector<4x256xf32>
    %165 = arith.addf %159, %164 : vector<4x256xf32>
    %166 = vector.extract_strided_slice %130 {offsets = [0, 6], sizes = [4, 1], strides = [1, 1]} : vector<4x8xf32> to vector<4x1xf32>
    %167 = vector.extract_strided_slice %129 {offsets = [6, 0], sizes = [1, 256], strides = [1, 1]} : vector<8x256xf32> to vector<1x256xf32>
    %168 = vector.broadcast %166 : vector<4x1xf32> to vector<4x256xf32>
    %169 = vector.broadcast %167 : vector<1x256xf32> to vector<4x256xf32>
    %170 = arith.mulf %168, %169 : vector<4x256xf32>
    %171 = arith.addf %165, %170 : vector<4x256xf32>
    %172 = vector.extract_strided_slice %130 {offsets = [0, 7], sizes = [4, 1], strides = [1, 1]} : vector<4x8xf32> to vector<4x1xf32>
    %173 = vector.extract_strided_slice %129 {offsets = [7, 0], sizes = [1, 256], strides = [1, 1]} : vector<8x256xf32> to vector<1x256xf32>
    %174 = vector.broadcast %172 : vector<4x1xf32> to vector<4x256xf32>
    %175 = vector.broadcast %173 : vector<1x256xf32> to vector<4x256xf32>
    %176 = arith.mulf %174, %175 : vector<4x256xf32>
    %177 = arith.addf %171, %176 : vector<4x256xf32>
    %c0_28 = arith.constant 0 : index
    %c0_29 = arith.constant 0 : index
    %178 = vector.load %arg8[%c0_28, %c0_29] : memref<4x1xf32, #tpu.memory_space<vmem>>, vector<4x1xf32>
    %179 = vector.broadcast %178 : vector<4x1xf32> to vector<4x256xf32>
    %180 = arith.addf %177, %179 : vector<4x256xf32>
    %181 = arith.addf %180, %1 : vector<4x256xf32>
    %c0_30 = arith.constant 0 : index
    %c0_31 = arith.constant 0 : index
    %c0_32 = arith.constant 0 : index
    %182 = vector.load %arg9[%c0_30, %c0_31, %c0_32] : memref<1x4x256xf32, #tpu.memory_space<vmem>>, vector<1x4x256xf32>
    %183 = vector.shape_cast %182 : vector<1x4x256xf32> to vector<4x256xf32>
    %184 = vector.shape_cast %181 : vector<4x256xf32> to vector<1x4x256xf32>
    tpu.vector_store %arg9[%c0_30, %c0_31, %c0_32], %184 {strides = array<i32>} : memref<1x4x256xf32, #tpu.memory_space<vmem>>, vector<1x4x256xf32>,
    return
  }
  func.func @transform_0(%arg0: i32) -> (i32, i32, i32) {
    %c0_i32 = arith.constant 0 : i32
    %c0_i32_0 = arith.constant 0 : i32
    %c0_i32_1 = arith.constant 0 : i32
    return %arg0, %c0_i32, %c0_i32_0 : i32, i32, i32
  }
  func.func @transform_1(%arg0: i32) -> (i32, i32) {
    %c0_i32 = arith.constant 0 : i32
    %c0_i32_0 = arith.constant 0 : i32
    %c0_i32_1 = arith.constant 0 : i32
    return %c0_i32, %c0_i32_0 : i32, i32
  }
  func.func @transform_2(%arg0: i32) -> (i32, i32) {
    %c0_i32 = arith.constant 0 : i32
    %c0_i32_0 = arith.constant 0 : i32
    %c0_i32_1 = arith.constant 0 : i32
    return %c0_i32, %c0_i32_0 : i32, i32
  }
  func.func @transform_3(%arg0: i32) -> (i32, i32) {
    %c0_i32 = arith.constant 0 : i32
    %c0_i32_0 = arith.constant 0 : i32
    %c0_i32_1 = arith.constant 0 : i32
    return %c0_i32, %c0_i32_0 : i32, i32
  }
  func.func @transform_4(%arg0: i32) -> (i32, i32) {
    %c0_i32 = arith.constant 0 : i32
    %c0_i32_0 = arith.constant 0 : i32
    %c0_i32_1 = arith.constant 0 : i32
    return %c0_i32, %c0_i32_0 : i32, i32
  }
  func.func @transform_5(%arg0: i32) -> (i32, i32) {
    %c0_i32 = arith.constant 0 : i32
    %c0_i32_0 = arith.constant 0 : i32
    %c0_i32_1 = arith.constant 0 : i32
    return %c0_i32, %c0_i32_0 : i32, i32
  }
  func.func @transform_6(%arg0: i32) -> (i32, i32) {
    %c0_i32 = arith.constant 0 : i32
    %c0_i32_0 = arith.constant 0 : i32
    %c0_i32_1 = arith.constant 0 : i32
    return %c0_i32, %c0_i32_0 : i32, i32
  }
  func.func @transform_7(%arg0: i32) -> (i32, i32) {
    %c0_i32 = arith.constant 0 : i32
    %c0_i32_0 = arith.constant 0 : i32
    %c0_i32_1 = arith.constant 0 : i32
    return %c0_i32, %c0_i32_0 : i32, i32
  }
  func.func @transform_8(%arg0: i32) -> (i32, i32, i32) {
    %c0_i32 = arith.constant 0 : i32
    %c0_i32_0 = arith.constant 0 : i32
    %c0_i32_1 = arith.constant 0 : i32
    return %arg0, %c0_i32, %c0_i32_0 : i32, i32, i32
  }
}

</mosaic_0001>

<llo_original>
// kernel: tpu_custom_call.1
$region0: #{tpu_custom_call.1}
  #allocation0 [shape = 'u32[]', space=smem, size = 0x4, offset = 0x4, fixed_abs, tag = 'smem constant byte address 0x4 - core index']
  #allocation1 [shape = 'u32[72,128]{1,0:T(1,128)}', space=vmem, size = 0x9000, scoped, tag = 'internal scratch']
  %s0 = inlined_call_operand.vmem [shape: f32[2,4,256], index: 0, kind: input, shape index: {}]
  %s1 = inlined_call_operand.vmem [shape: s32[1,256], index: 1, kind: input, shape index: {}]
  %s2 = inlined_call_operand.vmem [shape: f32[8,4], index: 2, kind: input, shape index: {}]
  %s3 = inlined_call_operand.vmem [shape: f32[8,1], index: 3, kind: input, shape index: {}]
  %s4 = inlined_call_operand.vmem [shape: f32[8,9], index: 4, kind: input, shape index: {}]
  %s5 = inlined_call_operand.vmem [shape: f32[8,1], index: 5, kind: input, shape index: {}]
  %s6 = inlined_call_operand.vmem [shape: f32[4,8], index: 6, kind: input, shape index: {}]
  %s7 = inlined_call_operand.vmem [shape: f32[4,1], index: 7, kind: input, shape index: {}]
  %s8 = inlined_call_operand.hbm [shape: f32[2,4,256], index: 8, kind: output, shape index: {}]
  %s9 = sld [smem:[#allocation0]]
  $region65: #{tpu_custom_call.1} parent=0
    _
  %s11 = ssub.s32 1, %s9
  %s12 = scalar_select 0, %s11, %s9
  $region1: #{tpu_custom_call.1} parent=0
    #allocation2 [shape = 'u8[8192]{0}', space=vmem, size = 0x2000, scoped, tag = 'output window, operand 0']
    #allocation3 [shape = 's32[2]{0}', space=sflag, size = 0x8, scoped, tag = 'scoped memory for tpu_custom_call.1']
    %13 = vsyncpa [#allocation3], 0
    %s14 = scalar_lea.sflag [#allocation3], 1
    %15 = vsyncpa %s14, 0
    loop: start=0, step=1, limit=4
    $region2: #{tpu_custom_call.1} parent=1 // loop_pre_header
      _
    $region3: #{tpu_custom_call.1} parent=1 // loop_header
      %s17 = sphi 0, %s21
      %p18 = scmp.ge.s32.totalorder %s17, 4
      %s27 = sphi 0, %s29
      %s30 = sphi 0, %s27
      %s31 = sphi 0, %s30
      %s47 = sphi 0, %s31
      %s51 = sphi 0, %s51
      %s53 = sphi 0, %s51
      %s54 = sphi 0, %s53
      %s68 = sphi 0, %s54
      %s72 = sphi 0, %s72
      %s74 = sphi 0, %s72
      %s75 = sphi 0, %s74
      %s89 = sphi 0, %s75
      %s93 = sphi 0, %s93
      %s95 = sphi 0, %s93
      %s96 = sphi 0, %s95
      %s110 = sphi 0, %s96
      %s114 = sphi 0, %s114
      %s116 = sphi 0, %s114
      %s117 = sphi 0, %s116
      %s131 = sphi 0, %s117
      %s135 = sphi 0, %s135
      %s137 = sphi 0, %s135
      %s138 = sphi 0, %s137
      %s152 = sphi 0, %s138
      %s156 = sphi 0, %s156
      %s158 = sphi 0, %s156
      %s159 = sphi 0, %s158
      %s173 = sphi 0, %s159
      %s177 = sphi 0, %s177
      %s179 = sphi 0, %s177
      %s180 = sphi 0, %s179
      %s194 = sphi 0, %s180
      %s200 = sphi 0, %s202
      %s203 = sphi 0, %s200
      %s204 = sphi 0, %s203
      %s220 = sphi 0, %s204
    $region4: #{tpu_custom_call.1} parent=1 // loop_header_branch
      %20 = sbr.rel (%p18) target = $region8
    $region5: #{tpu_custom_call.1} parent=1 // loop_body
      %s22 = ssub.s32 %s17, 1
      %s23 = ssub.s32 %s17, 2
      %s24 = sadd.s32 %s17, 1
      %s25 = ssub.s32 %s17, %s24
      %p26 = scmp.eq.s32.totalorder %s25, 0
      %s28 = sadd.s32 %s27, 1
      %s29 = scalar_select %p26, %s27, %s28
      %p32 = pneg %p26
      %p33 = scmp.eq.s32.totalorder %s17, 1
      %p34 = por %p32, %p33
      %p35 = scmp.ne.s32.totalorder %s27, %s30
      %p36 = scmp.eq.s32.totalorder %s17, 0
      %p37 = por %p35, %p36
      %p38 = scmp.ne.s32.totalorder %s27, %s30
      %p39 = scmp.eq.s32.totalorder %s22, 1
      %p40 = por %p38, %p39
      %p41 = scmp.ne.s32.totalorder %s30, %s31
      %p42 = scmp.eq.s32.totalorder %s22, 0
      %p43 = por %p41, %p42
      %p44 = scmp.ne.s32.totalorder %s30, %s31
      %p45 = scmp.eq.s32.totalorder %s23, 1
      %p46 = por %p44, %p45
      %p48 = scmp.ne.s32.totalorder %s31, %s47
      %p49 = scmp.eq.s32.totalorder %s23, 0
      %p50 = por %p48, %p49
      %s52 = sadd.s32 %s51, 1
      %p55 = scmp.eq.s32.totalorder %s17, 1
      %p56 = scmp.ne.s32.totalorder %s51, %s53
      %p57 = scmp.eq.s32.totalorder %s17, 0
      %p58 = por %p56, %p57
      %p59 = scmp.ne.s32.totalorder %s51, %s53
      %p60 = scmp.eq.s32.totalorder %s22, 1
      %p61 = por %p59, %p60
      %p62 = scmp.ne.s32.totalorder %s53, %s54
      %p63 = scmp.eq.s32.totalorder %s22, 0
      %p64 = por %p62, %p63
      %p65 = scmp.ne.s32.totalorder %s53, %s54
      %p66 = scmp.eq.s32.totalorder %s23, 1
      %p67 = por %p65, %p66
      %p69 = scmp.ne.s32.totalorder %s54, %s68
      %p70 = scmp.eq.s32.totalorder %s23, 0
      %p71 = por %p69, %p70
      %s73 = sadd.s32 %s72, 1
      %p76 = scmp.eq.s32.totalorder %s17, 1
      %p77 = scmp.ne.s32.totalorder %s72, %s74
      %p78 = scmp.eq.s32.totalorder %s17, 0
      %p79 = por %p77, %p78
      %p80 = scmp.ne.s32.totalorder %s72, %s74
      %p81 = scmp.eq.s32.totalorder %s22, 1
      %p82 = por %p80, %p81
      %p83 = scmp.ne.s32.totalorder %s74, %s75
      %p84 = scmp.eq.s32.totalorder %s22, 0
      %p85 = por %p83, %p84
      %p86 = scmp.ne.s32.totalorder %s74, %s75
      %p87 = scmp.eq.s32.totalorder %s23, 1
      %p88 = por %p86, %p87
      %p90 = scmp.ne.s32.totalorder %s75, %s89
      %p91 = scmp.eq.s32.totalorder %s23, 0
      %p92 = por %p90, %p91
      %s94 = sadd.s32 %s93, 1
      %p97 = scmp.eq.s32.totalorder %s17, 1
      %p98 = scmp.ne.s32.totalorder %s93, %s95
      %p99 = scmp.eq.s32.totalorder %s17, 0
      %p100 = por %p98, %p99
      %p101 = scmp.ne.s32.totalorder %s93, %s95
      %p102 = scmp.eq.s32.totalorder %s22, 1
      %p103 = por %p101, %p102
      %p104 = scmp.ne.s32.totalorder %s95, %s96
      %p105 = scmp.eq.s32.totalorder %s22, 0
      %p106 = por %p104, %p105
      %p107 = scmp.ne.s32.totalorder %s95, %s96
      %p108 = scmp.eq.s32.totalorder %s23, 1
      %p109 = por %p107, %p108
      %p111 = scmp.ne.s32.totalorder %s96, %s110
      %p112 = scmp.eq.s32.totalorder %s23, 0
      %p113 = por %p111, %p112
      %s115 = sadd.s32 %s114, 1
      %p118 = scmp.eq.s32.totalorder %s17, 1
      %p119 = scmp.ne.s32.totalorder %s114, %s116
      %p120 = scmp.eq.s32.totalorder %s17, 0
      %p121 = por %p119, %p120
      %p122 = scmp.ne.s32.totalorder %s114, %s116
      %p123 = scmp.eq.s32.totalorder %s22, 1
      %p124 = por %p122, %p123
      %p125 = scmp.ne.s32.totalorder %s116, %s117
      %p126 = scmp.eq.s32.totalorder %s22, 0
      %p127 = por %p125, %p126
      %p128 = scmp.ne.s32.totalorder %s116, %s117
      %p129 = scmp.eq.s32.totalorder %s23, 1
      %p130 = por %p128, %p129
      %p132 = scmp.ne.s32.totalorder %s117, %s131
      %p133 = scmp.eq.s32.totalorder %s23, 0
      %p134 = por %p132, %p133
      %s136 = sadd.s32 %s135, 1
      %p139 = scmp.eq.s32.totalorder %s17, 1
      %p140 = scmp.ne.s32.totalorder %s135, %s137
      %p141 = scmp.eq.s32.totalorder %s17, 0
      %p142 = por %p140, %p141
      %p143 = scmp.ne.s32.totalorder %s135, %s137
      %p144 = scmp.eq.s32.totalorder %s22, 1
      %p145 = por %p143, %p144
      %p146 = scmp.ne.s32.totalorder %s137, %s138
      %p147 = scmp.eq.s32.totalorder %s22, 0
      %p148 = por %p146, %p147
      %p149 = scmp.ne.s32.totalorder %s137, %s138
      %p150 = scmp.eq.s32.totalorder %s23, 1
      %p151 = por %p149, %p150
      %p153 = scmp.ne.s32.totalorder %s138, %s152
      %p154 = scmp.eq.s32.totalorder %s23, 0
      %p155 = por %p153, %p154
      %s157 = sadd.s32 %s156, 1
      %p160 = scmp.eq.s32.totalorder %s17, 1
      %p161 = scmp.ne.s32.totalorder %s156, %s158
      %p162 = scmp.eq.s32.totalorder %s17, 0
      %p163 = por %p161, %p162
      %p164 = scmp.ne.s32.totalorder %s156, %s158
      %p165 = scmp.eq.s32.totalorder %s22, 1
      %p166 = por %p164, %p165
      %p167 = scmp.ne.s32.totalorder %s158, %s159
      %p168 = scmp.eq.s32.totalorder %s22, 0
      %p169 = por %p167, %p168
      %p170 = scmp.ne.s32.totalorder %s158, %s159
      %p171 = scmp.eq.s32.totalorder %s23, 1
      %p172 = por %p170, %p171
      %p174 = scmp.ne.s32.totalorder %s159, %s173
      %p175 = scmp.eq.s32.totalorder %s23, 0
      %p176 = por %p174, %p175
      %s178 = sadd.s32 %s177, 1
      %p181 = scmp.eq.s32.totalorder %s17, 1
      %p182 = scmp.ne.s32.totalorder %s177, %s179
      %p183 = scmp.eq.s32.totalorder %s17, 0
      %p184 = por %p182, %p183
      %p185 = scmp.ne.s32.totalorder %s177, %s179
      %p186 = scmp.eq.s32.totalorder %s22, 1
      %p187 = por %p185, %p186
      %p188 = scmp.ne.s32.totalorder %s179, %s180
      %p189 = scmp.eq.s32.totalorder %s22, 0
      %p190 = por %p188, %p189
      %p191 = scmp.ne.s32.totalorder %s179, %s180
      %p192 = scmp.eq.s32.totalorder %s23, 1
      %p193 = por %p191, %p192
      %p195 = scmp.ne.s32.totalorder %s180, %s194
      %p196 = scmp.eq.s32.totalorder %s23, 0
      %p197 = por %p195, %p196
      %s198 = ssub.s32 %s17, %s24
      %p199 = scmp.eq.s32.totalorder %s198, 0
      %s201 = sadd.s32 %s200, 1
      %s202 = scalar_select %p199, %s200, %s201
      %p205 = pneg %p199
      %p206 = scmp.eq.s32.totalorder %s17, 1
      %p207 = por %p205, %p206
      %p208 = scmp.ne.s32.totalorder %s200, %s203
      %p209 = scmp.eq.s32.totalorder %s17, 0
      %p210 = por %p208, %p209
      %p211 = scmp.ne.s32.totalorder %s200, %s203
      %p212 = scmp.eq.s32.totalorder %s22, 1
      %p213 = por %p211, %p212
      %p214 = scmp.ne.s32.totalorder %s203, %s204
      %p215 = scmp.eq.s32.totalorder %s22, 0
      %p216 = por %p214, %p215
      %p217 = scmp.ne.s32.totalorder %s203, %s204
      %p218 = scmp.eq.s32.totalorder %s23, 1
      %p219 = por %p217, %p218
      %p221 = scmp.ne.s32.totalorder %s204, %s220
      %p222 = scmp.eq.s32.totalorder %s23, 0
      %p223 = por %p221, %p222
      %p224 = scmp.le.s32.totalorder 1, %s17
      %p225 = scmp.lt.s32.totalorder %s17, 3
      %p226 = pnand %p224, %p225
      %p227 = pneg %p226
      // Predicated region
      $region9: #{tpu_custom_call.1} parent=5 // pred_check
        _
      $region10: #{tpu_custom_call.1} parent=5 // pred_check_branch
        %229 = sbr.rel (%p226) target = $region12
      $region11: #{tpu_custom_call.1} parent=5 // pred_region
        %s230 = ssub.s32 %s17, 1
        // Predicated region
        $region13: #{tpu_custom_call.1} parent=11 // pred_check
          %p231 = pneg %p64
        $region14: #{tpu_custom_call.1} parent=11 // pred_check_branch
          %233 = sbr.rel (%p231) target = $region16
        $region15: #{tpu_custom_call.1} parent=11 // pred_region
          _
        $region16: #{tpu_custom_call.1} parent=11 // pred_fallthru
          _
        // Predicated region
        $region17: #{tpu_custom_call.1} parent=11 // pred_check
          %p234 = pneg %p85
        $region18: #{tpu_custom_call.1} parent=11 // pred_check_branch
          %236 = sbr.rel (%p234) target = $region20
        $region19: #{tpu_custom_call.1} parent=11 // pred_region
          _
        $region20: #{tpu_custom_call.1} parent=11 // pred_fallthru
          _
        // Predicated region
        $region21: #{tpu_custom_call.1} parent=11 // pred_check
          %p237 = pneg %p106
        $region22: #{tpu_custom_call.1} parent=11 // pred_check_branch
          %239 = sbr.rel (%p237) target = $region24
        $region23: #{tpu_custom_call.1} parent=11 // pred_region
          _
        $region24: #{tpu_custom_call.1} parent=11 // pred_fallthru
          _
        // Predicated region
        $region25: #{tpu_custom_call.1} parent=11 // pred_check
          %p240 = pneg %p127
        $region26: #{tpu_custom_call.1} parent=11 // pred_check_branch
          %242 = sbr.rel (%p240) target = $region28
        $region27: #{tpu_custom_call.1} parent=11 // pred_region
          _
        $region28: #{tpu_custom_call.1} parent=11 // pred_fallthru
          _
        // Predicated region
        $region29: #{tpu_custom_call.1} parent=11 // pred_check
          %p243 = pneg %p148
        $region30: #{tpu_custom_call.1} parent=11 // pred_check_branch
          %245 = sbr.rel (%p243) target = $region32
        $region31: #{tpu_custom_call.1} parent=11 // pred_region
          _
        $region32: #{tpu_custom_call.1} parent=11 // pred_fallthru
          _
        // Predicated region
        $region33: #{tpu_custom_call.1} parent=11 // pred_check
          %p246 = pneg %p169
        $region34: #{tpu_custom_call.1} parent=11 // pred_check_branch
          %248 = sbr.rel (%p246) target = $region36
        $region35: #{tpu_custom_call.1} parent=11 // pred_region
          _
        $region36: #{tpu_custom_call.1} parent=11 // pred_fallthru
          _
        // Predicated region
        $region37: #{tpu_custom_call.1} parent=11 // pred_check
          %p249 = pneg %p190
        $region38: #{tpu_custom_call.1} parent=11 // pred_check_branch
          %251 = sbr.rel (%p249) target = $region40
        $region39: #{tpu_custom_call.1} parent=11 // pred_region
          _
        $region40: #{tpu_custom_call.1} parent=11 // pred_fallthru
          _
      $region12: #{tpu_custom_call.1} parent=5 // pred_fallthru
        _
      %p252 = scmp.lt.s32.totalorder %s17, 2
      // Predicated region
      $region41: #{tpu_custom_call.1} parent=5 // pred_check
        %p253 = pneg %p252
      $region42: #{tpu_custom_call.1} parent=5 // pred_check_branch
        %255 = sbr.rel (%p253) target = $region44
      $region43: #{tpu_custom_call.1} parent=5 // pred_region
        // Predicated region
        $region45: #{tpu_custom_call.1} parent=43 // pred_check
          %p256 = pneg %p37
        $region46: #{tpu_custom_call.1} parent=43 // pred_check_branch
          %258 = sbr.rel (%p256) target = $region48
        $region47: #{tpu_custom_call.1} parent=43 // pred_region
          %p259 = scmp.lt.s32.totalorder %s17, 1
          %s260 = scalar_select %p259, %s17, 1
          %s261 = smul.addr %s260, 2
          %s262 = smul.addr %s261, 4
          %s263 = scalar_lea.vmem %s0, %s262
        $region48: #{tpu_custom_call.1} parent=43 // pred_fallthru
          _
      $region44: #{tpu_custom_call.1} parent=5 // pred_fallthru
        _
      %p264 = scmp.le.s32.totalorder 1, %s17
      %p265 = scmp.lt.s32.totalorder %s17, 3
      %p266 = pnand %p264, %p265
      %p267 = pneg %p266
      // Predicated region
      $region49: #{tpu_custom_call.1} parent=5 // pred_check
        _
      $region50: #{tpu_custom_call.1} parent=5 // pred_check_branch
        %269 = sbr.rel (%p266) target = $region52
      $region51: #{tpu_custom_call.1} parent=5 // pred_region
        %s270 = ssub.s32 %s17, 1
        %p271 = scmp.lt.s32.totalorder %s22, 1
        %s272 = scalar_select %p271, %s22, 1
        %s273 = smul.addr %s272, 2
        %s274 = smul.addr %s273, 4
        %s275 = scalar_lea.vmem %s0, %s274
        %p276 = pneg %p43
        %p277 = pneg %p40
        %p278 = pneg %p64
        %p279 = pneg %p61
        %p280 = pneg %p85
        %p281 = pneg %p82
        %p282 = pneg %p106
        %p283 = pneg %p103
        %p284 = pneg %p127
        %p285 = pneg %p124
        %p286 = pneg %p148
        %p287 = pneg %p145
        %p288 = pneg %p169
        %p289 = pneg %p166
        %p290 = pneg %p190
        %p291 = pneg %p187
        %p292 = pneg %p216
        %p293 = pneg %p213
        %s294 = sand.u32 %s203, 1
        %s295 = scalar_lea.sflag [#allocation3], %s294
        %s296 = sand.u32 %s203, 1
        %s297 = smul.addr %s296, 8
        %s298 = scalar_lea.vmem [#allocation2], %s297
        %p299 = scmp.lt.s32.totalorder %s22, 1
        %s300 = scalar_select %p299, %s22, 1
        %s301 = smul.addr %s300, 2
        %s302 = smul.addr %s301, 4
        %s303 = scalar_lea.vmem %s0, %s302
        %v304 = vld [vmem:[%s303] sm:$0xff]
        %v305 = vld [vmem:[%s2] sm:$0xff]
        %307 = vset.pattern.permute.xlu0 0
        %308 = vperm.xlu0 %307, %v305
        %v309 = vpop.permute.xlu0 %308
        %v312 = vperm.slane %v304, 0
        %v313 = vperm.slane %v304, 4
        %v316 = vperm.slane %v312, 0
        %v317 = vperm.slane %v313, 0
        %v318 = vmul.f32 %v309, %v316
        %v319 = vmul.f32 %v309, %v317
        %320 = vset.pattern.permute.xlu0 1
        %321 = vperm.xlu0 %320, %v305
        %v322 = vpop.permute.xlu0 %321
        %v324 = vperm.slane %v304, 1
        %v325 = vperm.slane %v304, 5
        %v328 = vperm.slane %v324, 1
        %v329 = vperm.slane %v325, 1
        %v330 = vmul.f32 %v322, %v328
        %v331 = vmul.f32 %v322, %v329
        %v332 = vadd.f32 %v318, %v330
        %v333 = vadd.f32 %v319, %v331
        %334 = vset.pattern.permute.xlu0 2
        %335 = vperm.xlu0 %334, %v305
        %v336 = vpop.permute.xlu0 %335
        %v338 = vperm.slane %v304, 2
        %v339 = vperm.slane %v304, 6
        %v342 = vperm.slane %v338, 2
        %v343 = vperm.slane %v339, 2
        %v344 = vmul.f32 %v336, %v342
        %v345 = vmul.f32 %v336, %v343
        %v346 = vadd.f32 %v332, %v344
        %v347 = vadd.f32 %v333, %v345
        %348 = vset.pattern.permute.xlu0 3
        %349 = vperm.xlu0 %348, %v305
        %v350 = vpop.permute.xlu0 %349
        %v352 = vperm.slane %v304, 3
        %v353 = vperm.slane %v304, 7
        %v356 = vperm.slane %v352, 3
        %v357 = vperm.slane %v353, 3
        %v358 = vmul.f32 %v350, %v356
        %v359 = vmul.f32 %v350, %v357
        %v360 = vadd.f32 %v346, %v358
        %v361 = vadd.f32 %v347, %v359
        %v362 = vld [vmem:[%s3] sm:$0xff]
        %364 = vset.pattern.permute.xlu0 0
        %365 = vperm.xlu0 %364, %v362
        %v366 = vpop.permute.xlu0 %365
        %v368 = vadd.f32 %v360, %v366
        %v369 = vadd.f32 %v361, %v366
        %v370 = vmax.f32 %v368, 0.0
        %v371 = vmax.f32 %v369, 0.0
        %v372 = vmin.f32 %v370, 6.0
        %v373 = vmin.f32 %v371, 6.0
        %v374 = vlaneseq
        %v375 = vand.u32 %v374, 127
        %v376 = vadd.s32 %v375, 128
        %v377 = vld [vmem:[%s1] sm:$0x3]
        %vm378 = vcmp.ge.s32.totalorder %v375, 16
        %vm379 = vcmp.ge.s32.totalorder %v376, 16
        %vm380 = vcmp.lt.s32.totalorder %v375, 240
        %vm381 = vcmp.lt.s32.totalorder %v376, 240
        %vm382 = vcmp.ge.s32.totalorder %v377, 1
        %vm383 = vcmp.le.s32.totalorder %v377, 14
        %v384 = vld [vmem:[%s4] sm:$0xff]
        %386 = vset.pattern.permute.xlu0 4
        %387 = vperm.xlu0 %386, %v384
        %v388 = vpop.permute.xlu0 %387
        %v390 = vmul.f32 %v372, %v388
        %v391 = vmul.f32 %v373, %v388
        %392 = vrot.lane.b32.xlu0 %v372, 17
        %v393 = vpop.permute.xlu0 %392
        %394 = vrot.lane.b32.xlu0 %v373, 17
        %v395 = vpop.permute.xlu0 %394
        %vm396 = vcmp.lt.s32.totalorder %v375, 17
        %v397 = vsel %vm396, %v393, %v395
        %v398 = vsel %vm396, %v395, %v393
        %v399 = vsel %vm382, 1, 0
        %v400 = vperm.slane %v399, 0
        %v401 = vperm.slane %v399, 1
        %vm402 = vcmp.ne.s32.totalorder %v400, 0
        %vm403 = vcmp.ne.s32.totalorder %v401, 0
        %vm404 = vmand %vm378, %vm402
        %vm405 = vmand %vm379, %vm403
        %v406 = vsel %vm404, 1, 0
        %v407 = vsel %vm405, 1, 0
        %v408 = vperm.slane %v406, 0
        %v409 = vperm.slane %v407, 0
        %vm410 = vcmp.eq.s32.totalorder %v408, 1
        %vm411 = vcmp.eq.s32.totalorder %v409, 1
        %v412 = vsel %vm410, %v398, 0.0
        %v413 = vsel %vm411, %v397, 0.0
        %414 = vset.pattern.permute.xlu0 0
        %415 = vperm.xlu0 %414, %v384
        %v416 = vpop.permute.xlu0 %415
        %v418 = vmul.f32 %v412, %v416
        %v419 = vmul.f32 %v413, %v416
        %v420 = vadd.f32 %v390, %v418
        %v421 = vadd.f32 %v391, %v419
        %422 = vrot.lane.b32.xlu0 %v372, 16
        %v423 = vpop.permute.xlu0 %422
        %424 = vrot.lane.b32.xlu0 %v373, 16
        %v425 = vpop.permute.xlu0 %424
        %vm426 = vcmp.lt.s32.totalorder %v375, 16
        %v427 = vsel %vm426, %v423, %v425
        %v428 = vsel %vm426, %v425, %v423
        %v429 = vsel %vm378, 1, 0
        %v430 = vsel %vm379, 1, 0
        %vm431 = vcmp.eq.s32.totalorder %v429, 1
        %vm432 = vcmp.eq.s32.totalorder %v430, 1
        %v433 = vsel %vm431, %v428, 0.0
        %v434 = vsel %vm432, %v427, 0.0
        %435 = vset.pattern.permute.xlu0 1
        %436 = vperm.xlu0 %435, %v384
        %v437 = vpop.permute.xlu0 %436
        %v439 = vmul.f32 %v433, %v437
        %v440 = vmul.f32 %v434, %v437
        %v441 = vadd.f32 %v420, %v439
        %v442 = vadd.f32 %v421, %v440
        %443 = vrot.lane.b32.xlu0 %v372, 15
        %v444 = vpop.permute.xlu0 %443
        %445 = vrot.lane.b32.xlu0 %v373, 15
        %v446 = vpop.permute.xlu0 %445
        %vm447 = vcmp.lt.s32.totalorder %v375, 15
        %v448 = vsel %vm447, %v444, %v446
        %v449 = vsel %vm447, %v446, %v444
        %v450 = vsel %vm383, 1, 0
        %v451 = vperm.slane %v450, 0
        %v452 = vperm.slane %v450, 1
        %vm453 = vcmp.ne.s32.totalorder %v451, 0
        %vm454 = vcmp.ne.s32.totalorder %v452, 0
        %vm455 = vmand %vm378, %vm453
        %vm456 = vmand %vm379, %vm454
        %v457 = vsel %vm455, 1, 0
        %v458 = vsel %vm456, 1, 0
        %v459 = vperm.slane %v457, 0
        %v460 = vperm.slane %v458, 0
        %vm461 = vcmp.eq.s32.totalorder %v459, 1
        %vm462 = vcmp.eq.s32.totalorder %v460, 1
        %v463 = vsel %vm461, %v449, 0.0
        %v464 = vsel %vm462, %v448, 0.0
        %465 = vset.pattern.permute.xlu0 2
        %466 = vperm.xlu0 %465, %v384
        %v467 = vpop.permute.xlu0 %466
        %v469 = vmul.f32 %v463, %v467
        %v470 = vmul.f32 %v464, %v467
        %v471 = vadd.f32 %v441, %v469
        %v472 = vadd.f32 %v442, %v470
        %473 = vrot.lane.b32.xlu0 %v372, 1
        %v474 = vpop.permute.xlu0 %473
        %475 = vrot.lane.b32.xlu0 %v373, 1
        %v476 = vpop.permute.xlu0 %475
        %vm477 = vcmp.lt.s32.totalorder %v375, 1
        %v478 = vsel %vm477, %v474, %v476
        %v479 = vsel %vm477, %v476, %v474
        %vm480 = vcmp.eq.s32.totalorder %v400, 1
        %vm481 = vcmp.eq.s32.totalorder %v401, 1
        %v482 = vsel %vm480, %v479, 0.0
        %v483 = vsel %vm481, %v478, 0.0
        %484 = vset.pattern.permute.xlu0 3
        %485 = vperm.xlu0 %484, %v384
        %v486 = vpop.permute.xlu0 %485
        %v488 = vmul.f32 %v482, %v486
        %v489 = vmul.f32 %v483, %v486
        %v490 = vadd.f32 %v471, %v488
        %v491 = vadd.f32 %v472, %v489
        %492 = vrot.lane.b32.xlu0 %v372, 127
        %v493 = vpop.permute.xlu0 %492
        %494 = vrot.lane.b32.xlu0 %v373, 127
        %v495 = vpop.permute.xlu0 %494
        %vm496 = vcmp.lt.s32.totalorder %v375, 127
        %v497 = vsel %vm496, %v493, %v495
        %v498 = vsel %vm496, %v495, %v493
        %vm499 = vcmp.eq.s32.totalorder %v451, 1
        %vm500 = vcmp.eq.s32.totalorder %v452, 1
        %v501 = vsel %vm499, %v497, 0.0
        %v502 = vsel %vm500, %v498, 0.0
        %503 = vset.pattern.permute.xlu0 5
        %504 = vperm.xlu0 %503, %v384
        %v505 = vpop.permute.xlu0 %504
        %v507 = vmul.f32 %v501, %v505
        %v508 = vmul.f32 %v502, %v505
        %v509 = vadd.f32 %v490, %v507
        %v510 = vadd.f32 %v491, %v508
        %511 = vrot.lane.b32.xlu0 %v372, 113
        %v512 = vpop.permute.xlu0 %511
        %513 = vrot.lane.b32.xlu0 %v373, 113
        %v514 = vpop.permute.xlu0 %513
        %vm515 = vcmp.lt.s32.totalorder %v375, 113
        %v516 = vsel %vm515, %v512, %v514
        %v517 = vsel %vm515, %v514, %v512
        %vm518 = vmand %vm380, %vm402
        %vm519 = vmand %vm381, %vm403
        %v520 = vsel %vm518, 1, 0
        %v521 = vsel %vm519, 1, 0
        %v522 = vperm.slane %v520, 0
        %v523 = vperm.slane %v521, 0
        %vm524 = vcmp.eq.s32.totalorder %v522, 1
        %vm525 = vcmp.eq.s32.totalorder %v523, 1
        %v526 = vsel %vm524, %v516, 0.0
        %v527 = vsel %vm525, %v517, 0.0
        %528 = vset.pattern.permute.xlu0 6
        %529 = vperm.xlu0 %528, %v384
        %v530 = vpop.permute.xlu0 %529
        %v532 = vmul.f32 %v526, %v530
        %v533 = vmul.f32 %v527, %v530
        %v534 = vadd.f32 %v509, %v532
        %v535 = vadd.f32 %v510, %v533
        %536 = vrot.lane.b32.xlu0 %v372, 112
        %v537 = vpop.permute.xlu0 %536
        %538 = vrot.lane.b32.xlu0 %v373, 112
        %v539 = vpop.permute.xlu0 %538
        %vm540 = vcmp.lt.s32.totalorder %v375, 112
        %v541 = vsel %vm540, %v537, %v539
        %v542 = vsel %vm540, %v539, %v537
        %v543 = vsel %vm380, 1, 0
        %v544 = vsel %vm381, 1, 0
        %vm545 = vcmp.eq.s32.totalorder %v543, 1
        %vm546 = vcmp.eq.s32.totalorder %v544, 1
        %v547 = vsel %vm545, %v541, 0.0
        %v548 = vsel %vm546, %v542, 0.0
        %549 = vset.pattern.permute.xlu0 7
        %550 = vperm.xlu0 %549, %v384
        %v551 = vpop.permute.xlu0 %550
        %v553 = vmul.f32 %v547, %v551
        %v554 = vmul.f32 %v548, %v551
        %v555 = vadd.f32 %v534, %v553
        %v556 = vadd.f32 %v535, %v554
        %557 = vrot.lane.b32.xlu0 %v372, 111
        %v558 = vpop.permute.xlu0 %557
        %559 = vrot.lane.b32.xlu0 %v373, 111
        %v560 = vpop.permute.xlu0 %559
        %vm561 = vcmp.lt.s32.totalorder %v375, 111
        %v562 = vsel %vm561, %v558, %v560
        %v563 = vsel %vm561, %v560, %v558
        %vm564 = vmand %vm380, %vm453
        %vm565 = vmand %vm381, %vm454
        %v566 = vsel %vm564, 1, 0
        %v567 = vsel %vm565, 1, 0
        %v568 = vperm.slane %v566, 0
        %v569 = vperm.slane %v567, 0
        %vm570 = vcmp.eq.s32.totalorder %v568, 1
        %vm571 = vcmp.eq.s32.totalorder %v569, 1
        %v572 = vsel %vm570, %v562, 0.0
        %v573 = vsel %vm571, %v563, 0.0
        %574 = vset.pattern.permute.xlu0 8
        %575 = vperm.xlu0 %574, %v384
        %v576 = vpop.permute.xlu0 %575
        %v578 = vmul.f32 %v572, %v576
        %v579 = vmul.f32 %v573, %v576
        %v580 = vadd.f32 %v555, %v578
        %v581 = vadd.f32 %v556, %v579
        %v582 = vld [vmem:[%s5] sm:$0xff]
        %584 = vset.pattern.permute.xlu0 0
        %585 = vperm.xlu0 %584, %v582
        %v586 = vpop.permute.xlu0 %585
        %v588 = vadd.f32 %v580, %v586
        %v589 = vadd.f32 %v581, %v586
        %v590 = vmax.f32 %v588, 0.0
        %v591 = vmax.f32 %v589, 0.0
        %v592 = vmin.f32 %v590, 6.0
        %v593 = vmin.f32 %v591, 6.0
        %v594 = vld [vmem:[%s6] sm:$0xf]
        %596 = vset.pattern.permute.xlu0 0
        %597 = vperm.xlu0 %596, %v594
        %v598 = vpop.permute.xlu0 %597
        %v600 = vperm.slane %v592, 0
        %v601 = vperm.slane %v593, 0
        %v602 = vmul.f32 %v598, %v600
        %v603 = vmul.f32 %v598, %v601
        %604 = vset.pattern.permute.xlu0 1
        %605 = vperm.xlu0 %604, %v594
        %v606 = vpop.permute.xlu0 %605
        %v608 = vperm.slane %v592, 1
        %v609 = vperm.slane %v593, 1
        %v610 = vmul.f32 %v606, %v608
        %v611 = vmul.f32 %v606, %v609
        %v612 = vadd.f32 %v602, %v610
        %v613 = vadd.f32 %v603, %v611
        %614 = vset.pattern.permute.xlu0 2
        %615 = vperm.xlu0 %614, %v594
        %v616 = vpop.permute.xlu0 %615
        %v618 = vperm.slane %v592, 2
        %v619 = vperm.slane %v593, 2
        %v620 = vmul.f32 %v616, %v618
        %v621 = vmul.f32 %v616, %v619
        %v622 = vadd.f32 %v612, %v620
        %v623 = vadd.f32 %v613, %v621
        %624 = vset.pattern.permute.xlu0 3
        %625 = vperm.xlu0 %624, %v594
        %v626 = vpop.permute.xlu0 %625
        %v628 = vperm.slane %v592, 3
        %v629 = vperm.slane %v593, 3
        %v630 = vmul.f32 %v626, %v628
        %v631 = vmul.f32 %v626, %v629
        %v632 = vadd.f32 %v622, %v630
        %v633 = vadd.f32 %v623, %v631
        %634 = vset.pattern.permute.xlu0 4
        %635 = vperm.xlu0 %634, %v594
        %v636 = vpop.permute.xlu0 %635
        %v638 = vperm.slane %v592, 4
        %v639 = vperm.slane %v593, 4
        %v640 = vmul.f32 %v636, %v638
        %v641 = vmul.f32 %v636, %v639
        %v642 = vadd.f32 %v632, %v640
        %v643 = vadd.f32 %v633, %v641
        %644 = vset.pattern.permute.xlu0 5
        %645 = vperm.xlu0 %644, %v594
        %v646 = vpop.permute.xlu0 %645
        %v648 = vperm.slane %v592, 5
        %v649 = vperm.slane %v593, 5
        %v650 = vmul.f32 %v646, %v648
        %v651 = vmul.f32 %v646, %v649
        %v652 = vadd.f32 %v642, %v650
        %v653 = vadd.f32 %v643, %v651
        %654 = vset.pattern.permute.xlu0 6
        %655 = vperm.xlu0 %654, %v594
        %v656 = vpop.permute.xlu0 %655
        %v658 = vperm.slane %v592, 6
        %v659 = vperm.slane %v593, 6
        %v660 = vmul.f32 %v656, %v658
        %v661 = vmul.f32 %v656, %v659
        %v662 = vadd.f32 %v652, %v660
        %v663 = vadd.f32 %v653, %v661
        %664 = vset.pattern.permute.xlu0 7
        %665 = vperm.xlu0 %664, %v594
        %v666 = vpop.permute.xlu0 %665
        %v668 = vperm.slane %v592, 7
        %v669 = vperm.slane %v593, 7
        %v670 = vmul.f32 %v666, %v668
        %v671 = vmul.f32 %v666, %v669
        %v672 = vadd.f32 %v662, %v670
        %v673 = vadd.f32 %v663, %v671
        %v674 = vld [vmem:[%s7] sm:$0xf]
        %676 = vset.pattern.permute.xlu0 0
        %677 = vperm.xlu0 %676, %v674
        %v678 = vpop.permute.xlu0 %677
        %v680 = vadd.f32 %v672, %v678
        %v681 = vadd.f32 %v673, %v678
        %682 = vst [vmem:[#allocation1] ss:$2 sm:$0xff] %v304
        %v683 = vld.sshfl [vmem:[#allocation1] sm:$0xff pattern:$0x75316420]
        %v684 = vld.sshfl [vmem:[#allocation1 + $0x8] sm:$0xff pattern:$0x75316420]
        %v687 = vadd.f32 %v680, %v683
        %v688 = vadd.f32 %v681, %v684
        %v691 = vrot.slane %v688, 4
        %vm692 = vcmask 1043456
        %v693 = vsel %vm692, %v687, %v691
        %695 = vst [vmem:[%s298] sm:$0xff] %v693
        %s696 = sand.u32 %s203, 1
        %s697 = scalar_lea.sflag [#allocation3], %s696
        %s698 = sand.u32 %s203, 1
        %s699 = smul.addr %s698, 8
        %s700 = scalar_lea.vmem [#allocation2], %s699
        // Predicated region
        $region53: #{tpu_custom_call.1} parent=51 // pred_check
          %p701 = pneg %p213
        $region54: #{tpu_custom_call.1} parent=51 // pred_check_branch
          %703 = sbr.rel (%p701) target = $region56
        $region55: #{tpu_custom_call.1} parent=51 // pred_region
          %705 = vsyncadd %s697, 0
          %s706 = smul.addr %s22, 2
          %s707 = smul.addr %s706, 4
          %s708 = scalar_lea.hbm %s8, %s707
          %s710 = sshll.u32 %s700, 4
          %s711 = int_to_ptr.vmem [resolvable:$true] %s710
          %s712 = sshll.u32 %s708, 4
          %s713 = int_to_ptr.hbm [resolvable:$true] %s712
          %715 = dma.vmem_to_hbm [thread:$0]  %s711, 128, %s713, %s697
        $region56: #{tpu_custom_call.1} parent=51 // pred_fallthru
          _
      $region52: #{tpu_custom_call.1} parent=5 // pred_fallthru
        _
      %p716 = scmp.le.s32.totalorder 2, %s17
      // Predicated region
      $region57: #{tpu_custom_call.1} parent=5 // pred_check
        %p717 = pneg %p716
      $region58: #{tpu_custom_call.1} parent=5 // pred_check_branch
        %719 = sbr.rel (%p717) target = $region60
      $region59: #{tpu_custom_call.1} parent=5 // pred_region
        %s720 = ssub.s32 %s17, 2
        // Predicated region
        $region61: #{tpu_custom_call.1} parent=59 // pred_check
          %p721 = pneg %p219
        $region62: #{tpu_custom_call.1} parent=59 // pred_check_branch
          %723 = sbr.rel (%p721) target = $region64
        $region63: #{tpu_custom_call.1} parent=59 // pred_region
          %s724 = sand.u32 %s204, 1
          %s725 = scalar_lea.sflag [#allocation3], %s724
          %s726 = sand.u32 %s204, 1
          %s727 = smul.addr %s726, 8
          %s728 = scalar_lea.vmem [#allocation2], %s727
          %730 = dma.done %s725, 128
        $region64: #{tpu_custom_call.1} parent=59 // pred_fallthru
          _
      $region60: #{tpu_custom_call.1} parent=5 // pred_fallthru
        _
    $region6: #{tpu_custom_call.1} parent=1 // loop_footer
      %s21 = sadd.s32 1, %s17
    $region7: #{tpu_custom_call.1} parent=1 // loop_footer_branch
      %16 = sbr.rel target = $region3
    $region8: #{tpu_custom_call.1} parent=1 // loop_exit
      _
    %731 = vsyncpa [#allocation3], 1
    %s732 = scalar_lea.sflag [#allocation3], 1
    %733 = vsyncpa %s732, 1

</llo_original>
